<compile_context>
chip_gen: v7x
topology: tpu7x:2x2x1
jax: 0.10.0
libtpu: 0.0.40
codegen_flags: <defaults>
</compile_context>

<pallas_src>
import functools
import math

import jax
import jax.numpy as jnp
from jax.experimental import pallas as pl
from jax.experimental.pallas import tpu as pltpu


def _heads_kernel(x_ref, rhs_ref, bias_ref, w2_ref, b2_ref, w3_ref, invb3_ref,
                  out_ref, *, n_keep, off_h, n_hid):
    """Single-invocation fused prediction heads.

    x_ref    : (Mp, D)   rows = [hs flattened (b,l,q)-major | max-pooled (b,l) | pad]
    rhs_ref  : (D, 128)  fused [wc | fr0^T .. fr_{B-1}^T | wcnt | 0 | w1 | 0]
    bias_ref : (1, 128)  fused [bc |          0          | bcnt | 0 | b1 | 0]
    w2_ref   : (D, D), b2_ref: (1, D), w3_ref: (D, 2)
    invb3_ref: (Mp, 2)   precomputed [inverse_sigmoid(reference) + b3[0], b3[1]]
    out_ref  : (Mp, 128) packed [logits|masks|counts | boxes | zero pad]
    """
    f32 = jnp.float32
    x = x_ref[...]

    # One MXU push covers class head, mask head (all batches), count head and
    # bbox-MLP layer-1: they all share the same LHS.
    y = jnp.dot(x, rhs_ref[...], preferred_element_type=f32) + bias_ref[...]

    # bbox MLP layers 2 & 3 (layer-1 output lives in y[:, off_h : off_h+n_hid],
    # bias b1 already added via the fused bias row).
    h = jnp.maximum(y[:, off_h:off_h + n_hid], 0.0)
    h = jnp.maximum(jnp.dot(h, w2_ref[...], preferred_element_type=f32)
                    + b2_ref[...], 0.0)
    box = jax.nn.sigmoid(jnp.dot(h, w3_ref[...], preferred_element_type=f32)
                         + invb3_ref[...])

    # Lane-dense packed output slab: one full-width (128-lane) store.
    n_pad = out_ref.shape[1] - n_keep - box.shape[1]
    out_ref[...] = jnp.concatenate(
        [y[:, :n_keep], box, jnp.zeros((x.shape[0], n_pad), f32)], axis=1)


def embryoformer_heads(hs, init_reference, inter_references, frame_embeddings, params):
    """Pallas implementation of EmbryoFormer.parallel_prediction_matched heads.

    hs:               (L, B, Q, D)   decoder hidden states, all layers
    init_reference:   (B, Q, 1)
    inter_references: (L-1, B, Q, 1)
    frame_embeddings: (B, S, D)
    returns dict of stacked per-layer predictions (PyTorch layouts).
    """
    L, B, Q, D = hs.shape
    S = frame_embeddings.shape[1]
    C = params["wc"].shape[1]
    K = params["wcnt"].shape[1]
    f32 = jnp.float32

    M = B * L * Q                       # matmul rows for class/mask/bbox heads
    n_rows = M + B * L                  # + pooled rows for the count head
    Mp = ((n_rows + 7) // 8) * 8        # sublane-pad

    WIDTH = 128                         # lane-dense fused RHS / output width
    n_lm = C + B * S                    # [logits | per-batch mask blocks]
    n_keep = n_lm + K                   # + counts -> columns kept from fused matmul
    off_h = ((n_keep + 7) // 8) * 8     # where the w1 (MLP layer-1) columns live
    assert off_h + D <= WIDTH and n_keep + 2 <= WIDTH, "packed layout exceeds 128 lanes"

    # --- LHS: hs flattened (b-major) + query-max-pooled rows, zero-padded ----
    hs_flat = jnp.transpose(hs, (1, 0, 2, 3)).reshape(M, D).astype(f32)        # (M, D)
    pooled = jnp.transpose(jnp.max(hs, axis=2), (1, 0, 2)).reshape(B * L, D)   # (B*L, D)
    x_all = jnp.zeros((Mp, D), f32)
    x_all = x_all.at[:M].set(hs_flat)
    x_all = x_all.at[M:M + B * L].set(pooled.astype(f32))

    # --- fused RHS [wc | fr0^T..fr_{B-1}^T | wcnt | 0 | w1 | 0] + fused bias --
    fr_cols = jnp.transpose(frame_embeddings, (2, 0, 1)).reshape(D, B * S).astype(f32)
    rhs = jnp.zeros((D, WIDTH), f32)
    rhs = rhs.at[:, :C].set(params["wc"])
    rhs = rhs.at[:, C:n_lm].set(fr_cols)
    rhs = rhs.at[:, n_lm:n_keep].set(params["wcnt"])
    rhs = rhs.at[:, off_h:off_h + D].set(params["w1"])

    bias = jnp.zeros((1, WIDTH), f32)
    bias = bias.at[:, :C].set(params["bc"])
    bias = bias.at[:, n_lm:n_keep].set(params["bcnt"])
    bias = bias.at[:, off_h:off_h + D].set(params["b1"])

    # --- additive term for bbox layer-3: inverse_sigmoid(reference) + b3 -----
    # reference at layer l: init_reference if l==0 else inter_references[l-1]
    refs = jnp.concatenate([init_reference[None], inter_references], axis=0)   # (L,B,Q,1)
    refs_flat = jnp.transpose(refs, (1, 0, 2, 3)).reshape(M, 1)
    eps = 1e-5
    rc = jnp.clip(refs_flat, 0.0, 1.0)
    inv = jnp.log(jnp.maximum(rc, eps) / jnp.maximum(1.0 - rc, eps))           # (M, 1)
    invb3 = jnp.broadcast_to(params["b3"].astype(f32), (Mp, 2))
    invb3 = invb3.at[:M, 0:1].add(inv)                  # inv added to coord 0 only

    kernel = functools.partial(_heads_kernel, n_keep=n_keep, off_h=off_h, n_hid=D)

    grid_spec = pltpu.PrefetchScalarGridSpec(
        num_scalar_prefetch=0,
        grid=(1,),                       # single invocation: nothing to pipeline
        in_specs=[
            pl.BlockSpec((Mp, D), lambda i: (0, 0)),        # fused LHS
            pl.BlockSpec((D, WIDTH), lambda i: (0, 0)),     # fused RHS
            pl.BlockSpec((1, WIDTH), lambda i: (0, 0)),     # fused bias
            pl.BlockSpec((D, D), lambda i: (0, 0)),         # w2
            pl.BlockSpec((1, D), lambda i: (0, 0)),         # b2
            pl.BlockSpec((D, 2), lambda i: (0, 0)),         # w3
            pl.BlockSpec((Mp, 2), lambda i: (0, 0)),        # inverse_sigmoid + b3
        ],
        out_specs=pl.BlockSpec((Mp, WIDTH), lambda i: (0, 0)),
    )

    slab = pl.pallas_call(
        kernel,
        out_shape=jax.ShapeDtypeStruct((Mp, WIDTH), f32),
        grid_spec=grid_spec,
        compiler_params=pltpu.CompilerParams(dimension_semantics=("arbitrary",)),
    )(x_all, rhs, bias, params["w2"], params["b2"], params["w3"], invb3)

    # --- unpack the lane-dense slab back to PyTorch layouts (pure XLA) -------
    logits = jnp.transpose(slab[:M, :C].reshape(B, L, Q, C), (1, 0, 2, 3))      # (L,B,Q,C)
    boxes = jnp.transpose(slab[:M, n_keep:n_keep + 2].reshape(B, L, Q, 2),
                          (1, 0, 2, 3))                                          # (L,B,Q,2)
    counts = jnp.transpose(slab[M:M + B * L, n_lm:n_keep].reshape(B, L, K),
                           (1, 0, 2))                                            # (L,B,K)
    masks_all = slab[:M, C:n_lm].reshape(B, L, Q, B, S)
    masks = jnp.stack([masks_all[b, :, :, b, :] for b in range(B)], axis=0)      # (B,L,Q,S)
    masks = jnp.transpose(masks, (1, 0, 3, 2))                                    # (L,B,S,Q)

    return {"pred_logits": logits, "pred_count": counts,
            "pred_boxes": boxes, "pred_masks": masks}


def make_params(key, hidden_dim, num_classes, max_eseq_length):
    """Deterministic parameter init mirroring EmbryoFormer.__init__.

    NOTE: weights are stored transposed, i.e. (in_dim, out_dim).  Real PyTorch
    checkpoints store Linear weights as (out, in) and must be transposed when
    loaded.
    """
    ks = jax.random.split(key, 8)
    scale = 1.0 / math.sqrt(hidden_dim)
    K = max_eseq_length + 1
    prior_prob = 0.01
    bias_value = -math.log((1 - prior_prob) / prior_prob)

    params = {
        # class_head: random weight, bias filled with log-prior
        "wc": jax.random.normal(ks[0], (hidden_dim, num_classes), jnp.float32) * scale,
        "bc": jnp.full((1, num_classes), bias_value, jnp.float32),
        # count_head: plain Linear
        "wcnt": jax.random.normal(ks[1], (hidden_dim, K), jnp.float32) * scale,
        "bcnt": jax.random.normal(ks[2], (1, K), jnp.float32) * scale,
        # bbox_head MLP(hidden, hidden, 2, 3): last layer weight=0, bias=[0, -2]
        "w1": jax.random.normal(ks[3], (hidden_dim, hidden_dim), jnp.float32) * scale,
        "b1": jax.random.normal(ks[4], (1, hidden_dim), jnp.float32) * scale,
        "w2": jax.random.normal(ks[5], (hidden_dim, hidden_dim), jnp.float32) * scale,
        "b2": jax.random.normal(ks[6], (1, hidden_dim), jnp.float32) * scale,
        "w3": jnp.zeros((hidden_dim, 2), jnp.float32),
        "b3": jnp.array([[0.0, -2.0]], jnp.float32),
    }
    return params


if __name__ == "__main__":
    # Small synthetic shapes consistent with the module's forward.
    L = 3          # transformer.decoder.num_layers (num_pred)
    B = 2          # batch
    Q = 8          # num_queries
    D = 32         # hidden_dim (transformer.d_model)
    S = 16         # number of frames at feature level 0
    num_classes = 4
    max_eseq_length = 10

    key = jax.random.PRNGKey(0)
    k_hs, k_fr, k_ref0, k_refi, k_par = jax.random.split(key, 5)

    # TODO(synk): hs / references / frame_embeddings would come from the
    # external base_encoder + deformable transformer; synthesized here.
    hs = jax.random.normal(k_hs, (L, B, Q, D), jnp.float32)
    frame_embeddings = jax.random.normal(k_fr, (B, S, D), jnp.float32)
    init_reference = jax.nn.sigmoid(jax.random.normal(k_ref0, (B, Q, 1), jnp.float32))
    inter_references = jax.nn.sigmoid(
        jax.random.normal(k_refi, (L - 1, B, Q, 1), jnp.float32))

    params = make_params(k_par, D, num_classes, max_eseq_length)

    all_out = jax.jit(functools.partial(embryoformer_heads, params=params))(
        hs, init_reference, inter_references, frame_embeddings)
    all_out = jax.block_until_ready(all_out)

    # Assemble final output dict exactly like parallel_prediction_matched.
    out = {k: v[-1] for k, v in all_out.items()}
    ks_, vs_ = list(zip(*all_out.items()))
    out["aux_outputs"] = [{ks_[i]: vs_[i][j] for i in range(len(ks_))}
                          for j in range(L - 1)]
    # TODO(synk): criterion(out, dt['video_target']) is an external loss module.

    # Reference check in plain JAX (same math) to validate the kernel.
    def ref_heads(hs, init_ref, inter_ref, fr, p):
        refs = jnp.concatenate([init_ref[None], inter_ref], axis=0)
        logits = jnp.einsum("lbqd,dc->lbqc", hs, p["wc"]) + p["bc"][0]
        pooled = jnp.max(hs, axis=2)
        count = jnp.einsum("lbd,dk->lbk", pooled, p["wcnt"]) + p["bcnt"][0]
        h = jax.nn.relu(jnp.einsum("lbqd,de->lbqe", hs, p["w1"]) + p["b1"][0])
        h = jax.nn.relu(jnp.einsum("lbqd,de->lbqe", h, p["w2"]) + p["b2"][0])
        tmp = jnp.einsum("lbqd,de->lbqe", h, p["w3"]) + p["b3"][0]
        eps = 1e-5
        rc = jnp.clip(refs, 0.0, 1.0)
        inv = jnp.log(jnp.maximum(rc, eps) / jnp.maximum(1.0 - rc, eps))
        tmp = tmp.at[..., :1].add(inv)
        coords = jax.nn.sigmoid(tmp)
        masks = jnp.einsum("bsf,lbqf->lbsq", fr, hs)
        return logits, count, coords, masks

    rl, rc, rb, rm = ref_heads(hs, init_reference, inter_references,
                               frame_embeddings, params)
    # Loose tolerance: MXU f32 matmul emulation passes may differ slightly from
    # the XLA einsum reference; structural errors would still be O(1).
    tol = dict(atol=2e-2, rtol=2e-2)
    assert jnp.allclose(all_out["pred_logits"], rl, **tol), "logits mismatch"
    assert jnp.allclose(all_out["pred_count"], rc, **tol), "count mismatch"
    assert jnp.allclose(all_out["pred_boxes"], rb, **tol), "boxes mismatch"
    assert jnp.allclose(all_out["pred_masks"], rm, **tol), "masks mismatch"

    print("KERNEL_OK")
</pallas_src>

<mosaic_0001>
module attributes {stable_mosaic.version = 11 : i64} {
  func.func @_heads_kernel(%arg0: i32, %arg1: memref<56x32xf32, #tpu.memory_space<vmem>>, %arg2: memref<32x128xf32, #tpu.memory_space<vmem>>, %arg3: memref<1x128xf32, #tpu.memory_space<vmem>>, %arg4: memref<32x32xf32, #tpu.memory_space<vmem>>, %arg5: memref<1x32xf32, #tpu.memory_space<vmem>>, %arg6: memref<32x2xf32, #tpu.memory_space<vmem>>, %arg7: memref<56x2xf32, #tpu.memory_space<vmem>>, %arg8: memref<56x128xf32, #tpu.memory_space<vmem>>) attributes {dimension_semantics = [#tpu.dimension_semantics<arbitrary>], iteration_bounds = array<i64: 1>, scalar_prefetch = 0 : i64, scratch_operands = 0 : i64, tpu.core_type = #tpu.core_type<tc>, window_params = [{pipeline_mode = #tpu.pipeline_mode<synchronous>, transform_indices = @transform_0, window_bounds = array<i64: 56, 32>}, {pipeline_mode = #tpu.pipeline_mode<synchronous>, transform_indices = @transform_1, window_bounds = array<i64: 32, 128>}, {pipeline_mode = #tpu.pipeline_mode<synchronous>, transform_indices = @transform_2, window_bounds = array<i64: 1, 128>}, {pipeline_mode = #tpu.pipeline_mode<synchronous>, transform_indices = @transform_3, window_bounds = array<i64: 32, 32>}, {pipeline_mode = #tpu.pipeline_mode<synchronous>, transform_indices = @transform_4, window_bounds = array<i64: 1, 32>}, {pipeline_mode = #tpu.pipeline_mode<synchronous>, transform_indices = @transform_5, window_bounds = array<i64: 32, 2>}, {pipeline_mode = #tpu.pipeline_mode<synchronous>, transform_indices = @transform_6, window_bounds = array<i64: 56, 2>}, {pipeline_mode = #tpu.pipeline_mode<synchronous>, transform_indices = @transform_7, window_bounds = array<i64: 56, 128>}]} {
    %c0 = arith.constant 0 : index
    %c0_0 = arith.constant 0 : index
    %0 = vector.load %arg1[%c0, %c0_0] : memref<56x32xf32, #tpu.memory_space<vmem>>, vector<56x32xf32>
    %c0_1 = arith.constant 0 : index
    %c0_2 = arith.constant 0 : index
    %1 = vector.load %arg2[%c0_1, %c0_2] : memref<32x128xf32, #tpu.memory_space<vmem>>, vector<32x128xf32>
    %cst = arith.constant dense<0.000000e+00> : vector<56x128xf32>
    %2 = tpu.matmul %0, %1, %cst {dimension_numbers = #tpu.dot_dimension_numbers<[1], [0], [0], [1], [0, 0, 1, 1], [], []>} : vector<56x32xf32>, vector<32x128xf32>, vector<56x128xf32> -> vector<56x128xf32>
    %c0_3 = arith.constant 0 : index
    %c0_4 = arith.constant 0 : index
    %3 = vector.load %arg3[%c0_3, %c0_4] : memref<1x128xf32, #tpu.memory_space<vmem>>, vector<1x128xf32>
    %4 = vector.broadcast %3 : vector<1x128xf32> to vector<56x128xf32>
    %5 = arith.addf %2, %4 : vector<56x128xf32>
    %6 = vector.extract_strided_slice %5 {offsets = [0, 48], sizes = [56, 32], strides = [1, 1]} : vector<56x128xf32> to vector<56x32xf32>
    %cst_5 = arith.constant 0.000000e+00 : f32
    %7 = vector.broadcast %cst_5 : f32 to vector<56x32xf32>
    %8 = arith.maximumf %6, %7 : vector<56x32xf32>
    %c0_6 = arith.constant 0 : index
    %c0_7 = arith.constant 0 : index
    %9 = vector.load %arg4[%c0_6, %c0_7] : memref<32x32xf32, #tpu.memory_space<vmem>>, vector<32x32xf32>
    %cst_8 = arith.constant dense<0.000000e+00> : vector<56x32xf32>
    %10 = tpu.matmul %8, %9, %cst_8 {dimension_numbers = #tpu.dot_dimension_numbers<[1], [0], [0], [1], [0, 0, 1, 1], [], []>} : vector<56x32xf32>, vector<32x32xf32>, vector<56x32xf32> -> vector<56x32xf32>
    %c0_9 = arith.constant 0 : index
    %c0_10 = arith.constant 0 : index
    %11 = vector.load %arg5[%c0_9, %c0_10] : memref<1x32xf32, #tpu.memory_space<vmem>>, vector<1x32xf32>
    %12 = vector.broadcast %11 : vector<1x32xf32> to vector<56x32xf32>
    %13 = arith.addf %10, %12 : vector<56x32xf32>
    %cst_11 = arith.constant 0.000000e+00 : f32
    %14 = vector.broadcast %cst_11 : f32 to vector<56x32xf32>
    %15 = arith.maximumf %13, %14 : vector<56x32xf32>
    %c0_12 = arith.constant 0 : index
    %c0_13 = arith.constant 0 : index
    %16 = vector.load %arg6[%c0_12, %c0_13] : memref<32x2xf32, #tpu.memory_space<vmem>>, vector<32x2xf32>
    %cst_14 = arith.constant dense<0.000000e+00> : vector<56x2xf32>
    %17 = tpu.matmul %15, %16, %cst_14 {dimension_numbers = #tpu.dot_dimension_numbers<[1], [0], [0], [1], [0, 0, 1, 1], [], []>} : vector<56x32xf32>, vector<32x2xf32>, vector<56x2xf32> -> vector<56x2xf32>
    %c0_15 = arith.constant 0 : index
    %c0_16 = arith.constant 0 : index
    %18 = vector.load %arg7[%c0_15, %c0_16] : memref<56x2xf32, #tpu.memory_space<vmem>>, vector<56x2xf32>
    %19 = arith.addf %17, %18 : vector<56x2xf32>
    %20 = arith.negf %19 : vector<56x2xf32>
    %21 = math.exp %20 : vector<56x2xf32>
    %cst_17 = arith.constant 1.000000e+00 : f32
    %22 = vector.broadcast %cst_17 : f32 to vector<56x2xf32>
    %23 = arith.addf %22, %21 : vector<56x2xf32>
    %24 = arith.divf %22, %23 : vector<56x2xf32>
    %25 = vector.extract_strided_slice %5 {offsets = [0, 0], sizes = [56, 47], strides = [1, 1]} : vector<56x128xf32> to vector<56x47xf32>
    %cst_18 = arith.constant 0.000000e+00 : f32
    %26 = vector.broadcast %cst_18 : f32 to vector<56x79xf32>
    %27 = tpu.concatenate %25, %24, %26 in 1 : vector<56x47xf32>, vector<56x2xf32>, vector<56x79xf32> -> vector<56x128xf32>
    %c0_19 = arith.constant 0 : index
    %c0_20 = arith.constant 0 : index
    %28 = vector.load %arg8[%c0_19, %c0_20] : memref<56x128xf32, #tpu.memory_space<vmem>>, vector<56x128xf32>
    tpu.vector_store %arg8[%c0_19, %c0_20], %27 {strides = array<i32>} : memref<56x128xf32, #tpu.memory_space<vmem>>, vector<56x128xf32>,
    return
  }
  func.func @transform_0(%arg0: i32) -> (i32, i32) {
    %c0_i32 = arith.constant 0 : i32
    %c0_i32_0 = arith.constant 0 : i32
    %c0_i32_1 = arith.constant 0 : i32
    return %c0_i32, %c0_i32_0 : i32, i32
  }
  func.func @transform_1(%arg0: i32) -> (i32, i32) {
    %c0_i32 = arith.constant 0 : i32
    %c0_i32_0 = arith.constant 0 : i32
    %c0_i32_1 = arith.constant 0 : i32
    return %c0_i32, %c0_i32_0 : i32, i32
  }
  func.func @transform_2(%arg0: i32) -> (i32, i32) {
    %c0_i32 = arith.constant 0 : i32
    %c0_i32_0 = arith.constant 0 : i32
    %c0_i32_1 = arith.constant 0 : i32
    return %c0_i32, %c0_i32_0 : i32, i32
  }
  func.func @transform_3(%arg0: i32) -> (i32, i32) {
    %c0_i32 = arith.constant 0 : i32
    %c0_i32_0 = arith.constant 0 : i32
    %c0_i32_1 = arith.constant 0 : i32
    return %c0_i32, %c0_i32_0 : i32, i32
  }
  func.func @transform_4(%arg0: i32) -> (i32, i32) {
    %c0_i32 = arith.constant 0 : i32
    %c0_i32_0 = arith.constant 0 : i32
    %c0_i32_1 = arith.constant 0 : i32
    return %c0_i32, %c0_i32_0 : i32, i32
  }
  func.func @transform_5(%arg0: i32) -> (i32, i32) {
    %c0_i32 = arith.constant 0 : i32
    %c0_i32_0 = arith.constant 0 : i32
    %c0_i32_1 = arith.constant 0 : i32
    return %c0_i32, %c0_i32_0 : i32, i32
  }
  func.func @transform_6(%arg0: i32) -> (i32, i32) {
    %c0_i32 = arith.constant 0 : i32
    %c0_i32_0 = arith.constant 0 : i32
    %c0_i32_1 = arith.constant 0 : i32
    return %c0_i32, %c0_i32_0 : i32, i32
  }
  func.func @transform_7(%arg0: i32) -> (i32, i32) {
    %c0_i32 = arith.constant 0 : i32
    %c0_i32_0 = arith.constant 0 : i32
    %c0_i32_1 = arith.constant 0 : i32
    return %c0_i32, %c0_i32_0 : i32, i32
  }
}

</mosaic_0001>

<llo_original>
// kernel: embryoformer_heads.1
$region0: #{embryoformer_heads.1}
  #allocation0 [shape = 'u32[]', space=smem, size = 0x4, offset = 0x4, fixed_abs, tag = 'smem constant byte address 0x4 - core index']
  #allocation1 [shape = 'u32[144,128]{1,0:T(1,128)}', space=vmem, size = 0x12000, scoped, tag = 'internal scratch']
  %s0 = inlined_call_operand.vmem [shape: f32[56,32], index: 0, kind: input, shape index: {}]
  %s1 = inlined_call_operand.vmem [shape: f32[32,128], index: 1, kind: input, shape index: {}]
  %s2 = inlined_call_operand.vmem [shape: f32[1,128], index: 2, kind: input, shape index: {}]
  %s3 = inlined_call_operand.vmem [shape: f32[32,32], index: 3, kind: input, shape index: {}]
  %s4 = inlined_call_operand.vmem [shape: f32[1,32], index: 4, kind: input, shape index: {}]
  %s5 = inlined_call_operand.vmem [shape: f32[32,2], index: 5, kind: input, shape index: {}]
  %s6 = inlined_call_operand.vmem [shape: f32[56,2], index: 6, kind: input, shape index: {}]
  %s7 = inlined_call_operand.vmem [shape: f32[56,128], index: 7, kind: output, shape index: {}]
  %s8 = sld [smem:[#allocation0]]
  $region38: #{embryoformer_heads.1} parent=0
    _
  %s10 = ssub.s32 1, %s8
  %s11 = scalar_select 0, %s10, %s8
  // Predicated region
  $region2: #{embryoformer_heads.1} parent=0 // pred_check
    _
  $region3: #{embryoformer_heads.1} parent=0 // pred_check_branch
    %13 = sbr.rel (0) target = $region5
  $region4: #{embryoformer_heads.1} parent=0 // pred_region
    _
  $region5: #{embryoformer_heads.1} parent=0 // pred_fallthru
    _
  // Predicated region
  $region6: #{embryoformer_heads.1} parent=0 // pred_check
    _
  $region7: #{embryoformer_heads.1} parent=0 // pred_check_branch
    %15 = sbr.rel (0) target = $region9
  $region8: #{embryoformer_heads.1} parent=0 // pred_region
    _
  $region9: #{embryoformer_heads.1} parent=0 // pred_fallthru
    _
  // Predicated region
  $region10: #{embryoformer_heads.1} parent=0 // pred_check
    _
  $region11: #{embryoformer_heads.1} parent=0 // pred_check_branch
    %17 = sbr.rel (0) target = $region13
  $region12: #{embryoformer_heads.1} parent=0 // pred_region
    _
  $region13: #{embryoformer_heads.1} parent=0 // pred_fallthru
    _
  // Predicated region
  $region14: #{embryoformer_heads.1} parent=0 // pred_check
    _
  $region15: #{embryoformer_heads.1} parent=0 // pred_check_branch
    %19 = sbr.rel (0) target = $region17
  $region16: #{embryoformer_heads.1} parent=0 // pred_region
    _
  $region17: #{embryoformer_heads.1} parent=0 // pred_fallthru
    _
  // Predicated region
  $region18: #{embryoformer_heads.1} parent=0 // pred_check
    _
  $region19: #{embryoformer_heads.1} parent=0 // pred_check_branch
    %21 = sbr.rel (0) target = $region21
  $region20: #{embryoformer_heads.1} parent=0 // pred_region
    _
  $region21: #{embryoformer_heads.1} parent=0 // pred_fallthru
    _
  // Predicated region
  $region22: #{embryoformer_heads.1} parent=0 // pred_check
    _
  $region23: #{embryoformer_heads.1} parent=0 // pred_check_branch
    %23 = sbr.rel (0) target = $region25
  $region24: #{embryoformer_heads.1} parent=0 // pred_region
    _
  $region25: #{embryoformer_heads.1} parent=0 // pred_fallthru
    _
  // Predicated region
  $region26: #{embryoformer_heads.1} parent=0 // pred_check
    _
  $region27: #{embryoformer_heads.1} parent=0 // pred_check_branch
    %25 = sbr.rel (0) target = $region29
  $region28: #{embryoformer_heads.1} parent=0 // pred_region
    _
  $region29: #{embryoformer_heads.1} parent=0 // pred_fallthru
    _
  %v26 = vld [vmem:[%s0] sm:$0xff]
  %v27 = vld [vmem:[%s0 + $0x8] sm:$0xff]
  %v28 = vld [vmem:[%s0 + $0x10] sm:$0xff]
  %v29 = vld [vmem:[%s0 + $0x18] sm:$0xff]
  %v30 = vld [vmem:[%s0 + $0x20] sm:$0xff]
  %v31 = vld [vmem:[%s0 + $0x28] sm:$0xff]
  %v32 = vld [vmem:[%s0 + $0x30] sm:$0xff]
  %v33 = vld [vmem:[%s1] sm:$0xff]
  %v34 = vld [vmem:[%s1 + $0x8] sm:$0xff]
  %v35 = vld [vmem:[%s1 + $0x10] sm:$0xff]
  %v36 = vld [vmem:[%s1 + $0x18] sm:$0xff]
  %v37 = vld [vmem:[%s2] sm:$0x1]
  %v39 = vlaneseq
  %v40 = vshrl.u32 %v39, 7
  %v41 = vsub.s32 0, %v40
  %v42 = vrot.slane %v37, %v41
  %vm44 = vcmask 261120
  %v46 = vsel %vm44, %v26, 0
  %v49 = vsel %vm44, %v27, 0
  %v52 = vsel %vm44, %v28, 0
  %v55 = vsel %vm44, %v29, 0
  %v58 = vsel %vm44, %v30, 0
  %v61 = vsel %vm44, %v31, 0
  %v64 = vsel %vm44, %v32, 0
  %66 = vmatprep.subr.mxu0 0.0
  %67 = vmatpush1.msra.mxu0 %v33
  %68 = vmatprep.subr.mxu0 0.0
  %69 = vmatpush1.msra.mxu0 %v34
  %70 = vmatprep.subr.mxu0 0.0
  %71 = vmatpush1.msra.mxu0 %v35
  %72 = vmatprep.subr.mxu0 0.0
  %73 = vmatpush1.msra.mxu0 %v36
  %74 = vmatprep.subr.mxu0 0.0
  %75 = vmatpush1.msra.mxu0 0.0
  %76 = vmatprep.subr.mxu0 0.0
  %77 = vmatpush1.msra.mxu0 0.0
  %78 = vmatprep.subr.mxu0 0.0
  %79 = vmatpush1.msra.mxu0 0.0
  %80 = vmatprep.subr.mxu0 0.0
  %81 = vmatpush1.msra.mxu0 0.0
  %82 = vmatprep.subr.mxu0 0.0
  %83 = vmatpush1.msra.mxu0 0.0
  %84 = vmatprep.subr.mxu0 0.0
  %85 = vmatpush1.msra.mxu0 0.0
  %86 = vmatprep.subr.mxu0 0.0
  %87 = vmatpush1.msra.mxu0 0.0
  %88 = vmatprep.subr.mxu0 0.0
  %89 = vmatpush1.msra.mxu0 0.0
  %90 = vmatprep.subr.mxu0 0.0
  %91 = vmatpush1.msra.mxu0 0.0
  %92 = vmatprep.subr.mxu0 0.0
  %93 = vmatpush1.msra.mxu0 0.0
  %94 = vmatprep.subr.mxu0 0.0
  %95 = vmatpush1.msra.mxu0 0.0
  %96 = vmatprep.subr.mxu0 0.0
  %97 = vmatpush1.msra.mxu0 0.0
  %98 = vmatprep.subr.mxu0 0.0
  %99 = vmatpush1.msra.mxu0 0.0
  %100 = vmatprep.subr.mxu0 0.0
  %101 = vmatpush1.msra.mxu0 0.0
  %102 = vmatprep.subr.mxu0 0.0
  %103 = vmatpush1.msra.mxu0 0.0
  %104 = vmatprep.subr.mxu0 0.0
  %105 = vmatpush1.msra.mxu0 0.0
  %106 = vmatprep.subr.mxu0 0.0
  %107 = vmatpush1.msra.mxu0 0.0
  %108 = vmatprep.subr.mxu0 0.0
  %109 = vmatpush1.msra.mxu0 0.0
  %110 = vmatprep.subr.mxu0 0.0
  %111 = vmatpush1.msra.mxu0 0.0
  %112 = vmatprep.subr.mxu0 0.0
  %113 = vmatpush1.msra.mxu0 0.0
  %114 = vmatprep.subr.mxu0 0.0
  %115 = vmatpush1.msra.mxu0 0.0
  %116 = vmatprep.subr.mxu0 0.0
  %117 = vmatpush1.msra.mxu0 0.0
  %118 = vmatprep.subr.mxu0 0.0
  %119 = vmatpush1.msra.mxu0 0.0
  %120 = vmatprep.subr.mxu0 0.0
  %121 = vmatpush1.msra.mxu0 0.0
  %122 = vmatprep.subr.mxu0 0.0
  %123 = vmatpush1.msra.mxu0 0.0
  %124 = vmatprep.subr.mxu0 0.0
  %125 = vmatpush1.msra.mxu0 0.0
  %126 = vmatprep.subr.mxu0 0.0
  %127 = vmatpush1.msra.mxu0 0.0
  %128 = vmatprep.subr.mxu0 0.0
  %129 = vmatpush1.msra.mxu0 0.0
  %130 = vmatprep.mubr.f32.mxu0 0.0
  %131 = vmatmul.mubr.f32.gmra.mrb[0].mxu0 %v46
  %v132 = vpop.f32.mrb[0].mxu0
  %v133 = vadd.f32 %v42, %v132
  %v134 = vpop.f32.mrb[0].mxu0
  %135 = vmatprep.mubr.f32.mxu0 0.0
  %136 = vmatmul.mubr.f32.gmra.mrb[0].mxu0 %v49
  %v137 = vpop.f32.mrb[0].mxu0
  %v138 = vadd.f32 %v42, %v137
  %v139 = vpop.f32.mrb[0].mxu0
  %140 = vmatprep.mubr.f32.mxu0 0.0
  %141 = vmatmul.mubr.f32.gmra.mrb[0].mxu0 %v52
  %v142 = vpop.f32.mrb[0].mxu0
  %v143 = vadd.f32 %v42, %v142
  %v144 = vpop.f32.mrb[0].mxu0
  %145 = vmatprep.mubr.f32.mxu0 0.0
  %146 = vmatmul.mubr.f32.gmra.mrb[0].mxu0 %v55
  %v147 = vpop.f32.mrb[0].mxu0
  %v148 = vadd.f32 %v42, %v147
  %v149 = vpop.f32.mrb[0].mxu0
  %150 = vmatprep.mubr.f32.mxu0 0.0
  %151 = vmatmul.mubr.f32.gmra.mrb[0].mxu0 %v58
  %v152 = vpop.f32.mrb[0].mxu0
  %v153 = vadd.f32 %v42, %v152
  %v154 = vpop.f32.mrb[0].mxu0
  %155 = vmatprep.mubr.f32.mxu0 0.0
  %156 = vmatmul.mubr.f32.gmra.mrb[0].mxu0 %v61
  %v157 = vpop.f32.mrb[0].mxu0
  %v158 = vadd.f32 %v42, %v157
  %v159 = vpop.f32.mrb[0].mxu0
  %160 = vmatprep.mubr.f32.mxu0 0.0
  %161 = vmatmul.mubr.f32.gmra.mrb[0].mxu0 %v64
  %v162 = vpop.f32.mrb[0].mxu0
  %v163 = vadd.f32 %v42, %v162
  %v164 = vpop.f32.mrb[0].mxu0
  %165 = vdwg.mxu0
  %v166 = vmax.f32 %v133, 0.0
  %v167 = vmax.f32 %v138, 0.0
  %v168 = vmax.f32 %v143, 0.0
  %v169 = vmax.f32 %v148, 0.0
  %v170 = vmax.f32 %v153, 0.0
  %v171 = vmax.f32 %v158, 0.0
  %v172 = vmax.f32 %v163, 0.0
  %v173 = vld [vmem:[%s3] sm:$0xff]
  %v174 = vld [vmem:[%s3 + $0x8] sm:$0xff]
  %v175 = vld [vmem:[%s3 + $0x10] sm:$0xff]
  %v176 = vld [vmem:[%s3 + $0x18] sm:$0xff]
  %v177 = vld [vmem:[%s4] sm:$0x1]
  %v179 = vlaneseq
  %v180 = vshrl.u32 %v179, 7
  %v181 = vsub.s32 0, %v180
  %v182 = vrot.slane %v177, %v181
  %191 = vrot.lane.b32.xlu0 %v166, 80
  %v192 = vpop.permute.xlu0 %191
  %193 = vrot.lane.b32.xlu0 %v167, 80
  %v194 = vpop.permute.xlu0 %193
  %195 = vrot.lane.b32.xlu0 %v168, 80
  %v196 = vpop.permute.xlu0 %195
  %197 = vrot.lane.b32.xlu0 %v169, 80
  %v198 = vpop.permute.xlu0 %197
  %199 = vrot.lane.b32.xlu0 %v170, 80
  %v200 = vpop.permute.xlu0 %199
  %201 = vrot.lane.b32.xlu0 %v171, 80
  %v202 = vpop.permute.xlu0 %201
  %203 = vrot.lane.b32.xlu0 %v172, 80
  %v204 = vpop.permute.xlu0 %203
  %v205 = vsel %vm44, %v192, 0
  %v207 = vsel %vm44, %v194, 0
  %v209 = vsel %vm44, %v196, 0
  %v211 = vsel %vm44, %v198, 0
  %v213 = vsel %vm44, %v200, 0
  %v215 = vsel %vm44, %v202, 0
  %v217 = vsel %vm44, %v204, 0
  %219 = vmatprep.subr.mxu0 0.0
  %220 = vmatpush1.msra.mxu0 %v173
  %221 = vmatprep.subr.mxu0 0.0
  %222 = vmatpush1.msra.mxu0 %v174
  %223 = vmatprep.subr.mxu0 0.0
  %224 = vmatpush1.msra.mxu0 %v175
  %225 = vmatprep.subr.mxu0 0.0
  %226 = vmatpush1.msra.mxu0 %v176
  %227 = vmatprep.subr.mxu0 0.0
  %228 = vmatpush1.msra.mxu0 0.0
  %229 = vmatprep.subr.mxu0 0.0
  %230 = vmatpush1.msra.mxu0 0.0
  %231 = vmatprep.subr.mxu0 0.0
  %232 = vmatpush1.msra.mxu0 0.0
  %233 = vmatprep.subr.mxu0 0.0
  %234 = vmatpush1.msra.mxu0 0.0
  %235 = vmatprep.subr.mxu0 0.0
  %236 = vmatpush1.msra.mxu0 0.0
  %237 = vmatprep.subr.mxu0 0.0
  %238 = vmatpush1.msra.mxu0 0.0
  %239 = vmatprep.subr.mxu0 0.0
  %240 = vmatpush1.msra.mxu0 0.0
  %241 = vmatprep.subr.mxu0 0.0
  %242 = vmatpush1.msra.mxu0 0.0
  %243 = vmatprep.subr.mxu0 0.0
  %244 = vmatpush1.msra.mxu0 0.0
  %245 = vmatprep.subr.mxu0 0.0
  %246 = vmatpush1.msra.mxu0 0.0
  %247 = vmatprep.subr.mxu0 0.0
  %248 = vmatpush1.msra.mxu0 0.0
  %249 = vmatprep.subr.mxu0 0.0
  %250 = vmatpush1.msra.mxu0 0.0
  %251 = vmatprep.subr.mxu0 0.0
  %252 = vmatpush1.msra.mxu0 0.0
  %253 = vmatprep.subr.mxu0 0.0
  %254 = vmatpush1.msra.mxu0 0.0
  %255 = vmatprep.subr.mxu0 0.0
  %256 = vmatpush1.msra.mxu0 0.0
  %257 = vmatprep.subr.mxu0 0.0
  %258 = vmatpush1.msra.mxu0 0.0
  %259 = vmatprep.subr.mxu0 0.0
  %260 = vmatpush1.msra.mxu0 0.0
  %261 = vmatprep.subr.mxu0 0.0
  %262 = vmatpush1.msra.mxu0 0.0
  %263 = vmatprep.subr.mxu0 0.0
  %264 = vmatpush1.msra.mxu0 0.0
  %265 = vmatprep.subr.mxu0 0.0
  %266 = vmatpush1.msra.mxu0 0.0
  %267 = vmatprep.subr.mxu0 0.0
  %268 = vmatpush1.msra.mxu0 0.0
  %269 = vmatprep.subr.mxu0 0.0
  %270 = vmatpush1.msra.mxu0 0.0
  %271 = vmatprep.subr.mxu0 0.0
  %272 = vmatpush1.msra.mxu0 0.0
  %273 = vmatprep.subr.mxu0 0.0
  %274 = vmatpush1.msra.mxu0 0.0
  %275 = vmatprep.subr.mxu0 0.0
  %276 = vmatpush1.msra.mxu0 0.0
  %277 = vmatprep.subr.mxu0 0.0
  %278 = vmatpush1.msra.mxu0 0.0
  %279 = vmatprep.subr.mxu0 0.0
  %280 = vmatpush1.msra.mxu0 0.0
  %281 = vmatprep.subr.mxu0 0.0
  %282 = vmatpush1.msra.mxu0 0.0
  %283 = vmatprep.mubr.f32.mxu0 0.0
  %284 = vmatmul.mubr.f32.gmra.mrb[0].mxu0 %v205
  %v285 = vpop.f32.mrb[0].mxu0
  %v286 = vadd.f32 %v182, %v285
  %v287 = vpop.f32.mrb[0].mxu0
  %288 = vmatprep.mubr.f32.mxu0 0.0
  %289 = vmatmul.mubr.f32.gmra.mrb[0].mxu0 %v207
  %v290 = vpop.f32.mrb[0].mxu0
  %v291 = vadd.f32 %v182, %v290
  %v292 = vpop.f32.mrb[0].mxu0
  %293 = vmatprep.mubr.f32.mxu0 0.0
  %294 = vmatmul.mubr.f32.gmra.mrb[0].mxu0 %v209
  %v295 = vpop.f32.mrb[0].mxu0
  %v296 = vadd.f32 %v182, %v295
  %v297 = vpop.f32.mrb[0].mxu0
  %298 = vmatprep.mubr.f32.mxu0 0.0
  %299 = vmatmul.mubr.f32.gmra.mrb[0].mxu0 %v211
  %v300 = vpop.f32.mrb[0].mxu0
  %v301 = vadd.f32 %v182, %v300
  %v302 = vpop.f32.mrb[0].mxu0
  %303 = vmatprep.mubr.f32.mxu0 0.0
  %304 = vmatmul.mubr.f32.gmra.mrb[0].mxu0 %v213
  %v305 = vpop.f32.mrb[0].mxu0
  %v306 = vadd.f32 %v182, %v305
  %v307 = vpop.f32.mrb[0].mxu0
  %308 = vmatprep.mubr.f32.mxu0 0.0
  %309 = vmatmul.mubr.f32.gmra.mrb[0].mxu0 %v215
  %v310 = vpop.f32.mrb[0].mxu0
  %v311 = vadd.f32 %v182, %v310
  %v312 = vpop.f32.mrb[0].mxu0
  %313 = vmatprep.mubr.f32.mxu0 0.0
  %314 = vmatmul.mubr.f32.gmra.mrb[0].mxu0 %v217
  %v315 = vpop.f32.mrb[0].mxu0
  %v316 = vadd.f32 %v182, %v315
  %v317 = vpop.f32.mrb[0].mxu0
  %318 = vdwg.mxu0
  %v319 = vmax.f32 %v286, 0.0
  %v320 = vmax.f32 %v291, 0.0
  %v321 = vmax.f32 %v296, 0.0
  %v322 = vmax.f32 %v301, 0.0
  %v323 = vmax.f32 %v306, 0.0
  %v324 = vmax.f32 %v311, 0.0
  %v325 = vmax.f32 %v316, 0.0
  %v326 = vld [vmem:[%s5] sm:$0xff]
  %v327 = vld [vmem:[%s5 + $0x8] sm:$0xff]
  %v328 = vld [vmem:[%s5 + $0x10] sm:$0xff]
  %v329 = vld [vmem:[%s5 + $0x18] sm:$0xff]
  %v330 = vld [vmem:[%s6] sm:$0xff]
  %v331 = vld [vmem:[%s6 + $0x8] sm:$0xff]
  %v332 = vld [vmem:[%s6 + $0x10] sm:$0xff]
  %v333 = vld [vmem:[%s6 + $0x18] sm:$0xff]
  %v334 = vld [vmem:[%s6 + $0x20] sm:$0xff]
  %v335 = vld [vmem:[%s6 + $0x28] sm:$0xff]
  %v336 = vld [vmem:[%s6 + $0x30] sm:$0xff]
  %v338 = vsel %vm44, %v319, 0
  %v341 = vsel %vm44, %v320, 0
  %v344 = vsel %vm44, %v321, 0
  %v347 = vsel %vm44, %v322, 0
  %v350 = vsel %vm44, %v323, 0
  %v353 = vsel %vm44, %v324, 0
  %v356 = vsel %vm44, %v325, 0
  %358 = vmatprep.subr.mxu0 0.0
  %359 = vmatpush1.msra.mxu0 %v326
  %360 = vmatprep.subr.mxu0 0.0
  %361 = vmatpush1.msra.mxu0 %v327
  %362 = vmatprep.subr.mxu0 0.0
  %363 = vmatpush1.msra.mxu0 %v328
  %364 = vmatprep.subr.mxu0 0.0
  %365 = vmatpush1.msra.mxu0 %v329
  %366 = vmatprep.subr.mxu0 0.0
  %367 = vmatpush1.msra.mxu0 0.0
  %368 = vmatprep.subr.mxu0 0.0
  %369 = vmatpush1.msra.mxu0 0.0
  %370 = vmatprep.subr.mxu0 0.0
  %371 = vmatpush1.msra.mxu0 0.0
  %372 = vmatprep.subr.mxu0 0.0
  %373 = vmatpush1.msra.mxu0 0.0
  %374 = vmatprep.subr.mxu0 0.0
  %375 = vmatpush1.msra.mxu0 0.0
  %376 = vmatprep.subr.mxu0 0.0
  %377 = vmatpush1.msra.mxu0 0.0
  %378 = vmatprep.subr.mxu0 0.0
  %379 = vmatpush1.msra.mxu0 0.0
  %380 = vmatprep.subr.mxu0 0.0
  %381 = vmatpush1.msra.mxu0 0.0
  %382 = vmatprep.subr.mxu0 0.0
  %383 = vmatpush1.msra.mxu0 0.0
  %384 = vmatprep.subr.mxu0 0.0
  %385 = vmatpush1.msra.mxu0 0.0
  %386 = vmatprep.subr.mxu0 0.0
  %387 = vmatpush1.msra.mxu0 0.0
  %388 = vmatprep.subr.mxu0 0.0
  %389 = vmatpush1.msra.mxu0 0.0
  %390 = vmatprep.subr.mxu0 0.0
  %391 = vmatpush1.msra.mxu0 0.0
  %392 = vmatprep.subr.mxu0 0.0
  %393 = vmatpush1.msra.mxu0 0.0
  %394 = vmatprep.subr.mxu0 0.0
  %395 = vmatpush1.msra.mxu0 0.0
  %396 = vmatprep.subr.mxu0 0.0
  %397 = vmatpush1.msra.mxu0 0.0
  %398 = vmatprep.subr.mxu0 0.0
  %399 = vmatpush1.msra.mxu0 0.0
  %400 = vmatprep.subr.mxu0 0.0
  %401 = vmatpush1.msra.mxu0 0.0
  %402 = vmatprep.subr.mxu0 0.0
  %403 = vmatpush1.msra.mxu0 0.0
  %404 = vmatprep.subr.mxu0 0.0
  %405 = vmatpush1.msra.mxu0 0.0
  %406 = vmatprep.subr.mxu0 0.0
  %407 = vmatpush1.msra.mxu0 0.0
  %408 = vmatprep.subr.mxu0 0.0
  %409 = vmatpush1.msra.mxu0 0.0
  %410 = vmatprep.subr.mxu0 0.0
  %411 = vmatpush1.msra.mxu0 0.0
  %412 = vmatprep.subr.mxu0 0.0
  %413 = vmatpush1.msra.mxu0 0.0
  %414 = vmatprep.subr.mxu0 0.0
  %415 = vmatpush1.msra.mxu0 0.0
  %416 = vmatprep.subr.mxu0 0.0
  %417 = vmatpush1.msra.mxu0 0.0
  %418 = vmatprep.subr.mxu0 0.0
  %419 = vmatpush1.msra.mxu0 0.0
  %420 = vmatprep.subr.mxu0 0.0
  %421 = vmatpush1.msra.mxu0 0.0
  %422 = vmatprep.mubr.f32.mxu0 0.0
  %423 = vmatmul.mubr.f32.gmra.mrb[0].mxu0 %v338
  %v424 = vpop.f32.mrb[0].mxu0
  %v425 = vadd.f32 %v330, %v424
  %v426 = vpop.f32.mrb[0].mxu0
  %427 = vmatprep.mubr.f32.mxu0 0.0
  %428 = vmatmul.mubr.f32.gmra.mrb[0].mxu0 %v341
  %v429 = vpop.f32.mrb[0].mxu0
  %v430 = vadd.f32 %v331, %v429
  %v431 = vpop.f32.mrb[0].mxu0
  %432 = vmatprep.mubr.f32.mxu0 0.0
  %433 = vmatmul.mubr.f32.gmra.mrb[0].mxu0 %v344
  %v434 = vpop.f32.mrb[0].mxu0
  %v435 = vadd.f32 %v332, %v434
  %v436 = vpop.f32.mrb[0].mxu0
  %437 = vmatprep.mubr.f32.mxu0 0.0
  %438 = vmatmul.mubr.f32.gmra.mrb[0].mxu0 %v347
  %v439 = vpop.f32.mrb[0].mxu0
  %v440 = vadd.f32 %v333, %v439
  %v441 = vpop.f32.mrb[0].mxu0
  %442 = vmatprep.mubr.f32.mxu0 0.0
  %443 = vmatmul.mubr.f32.gmra.mrb[0].mxu0 %v350
  %v444 = vpop.f32.mrb[0].mxu0
  %v445 = vadd.f32 %v334, %v444
  %v446 = vpop.f32.mrb[0].mxu0
  %447 = vmatprep.mubr.f32.mxu0 0.0
  %448 = vmatmul.mubr.f32.gmra.mrb[0].mxu0 %v353
  %v449 = vpop.f32.mrb[0].mxu0
  %v450 = vadd.f32 %v335, %v449
  %v451 = vpop.f32.mrb[0].mxu0
  %452 = vmatprep.mubr.f32.mxu0 0.0
  %453 = vmatmul.mubr.f32.gmra.mrb[0].mxu0 %v356
  %v454 = vpop.f32.mrb[0].mxu0
  %v455 = vadd.f32 %v336, %v454
  %v456 = vpop.f32.mrb[0].mxu0
  %457 = vdwg.mxu0
  %v458 = vxor.u32 %v425, 2147483648
  %v459 = vxor.u32 %v430, 2147483648
  %v460 = vxor.u32 %v435, 2147483648
  %v461 = vxor.u32 %v440, 2147483648
  %v462 = vxor.u32 %v445, 2147483648
  %v463 = vxor.u32 %v450, 2147483648
  %v464 = vxor.u32 %v455, 2147483648
  %v465 = vmul.f32 %v458, 1.442695
  %v466 = vpow.pop %v465
  %v467 = vmul.f32 %v459, 1.442695
  %v468 = vpow.pop %v467
  %v469 = vmul.f32 %v460, 1.442695
  %v470 = vpow.pop %v469
  %v471 = vmul.f32 %v461, 1.442695
  %v472 = vpow.pop %v471
  %v473 = vmul.f32 %v462, 1.442695
  %v474 = vpow.pop %v473
  %v475 = vmul.f32 %v463, 1.442695
  %v476 = vpow.pop %v475
  %v477 = vmul.f32 %v464, 1.442695
  %v478 = vpow.pop %v477
  %v479 = vadd.f32 %v466, 1.0
  %v480 = vadd.f32 %v468, 1.0
  %v481 = vadd.f32 %v470, 1.0
  %v482 = vadd.f32 %v472, 1.0
  %v483 = vadd.f32 %v474, 1.0
  %v484 = vadd.f32 %v476, 1.0
  %v485 = vadd.f32 %v478, 1.0
  %v486 = vrcp.pop %v479
  %v487 = vmul.f32 1.0, %v486
  %v488 = vrcp.pop %v480
  %v489 = vmul.f32 1.0, %v488
  %v490 = vrcp.pop %v481
  %v491 = vmul.f32 1.0, %v490
  %v492 = vrcp.pop %v482
  %v493 = vmul.f32 1.0, %v492
  %v494 = vrcp.pop %v483
  %v495 = vmul.f32 1.0, %v494
  %v496 = vrcp.pop %v484
  %v497 = vmul.f32 1.0, %v496
  %v498 = vrcp.pop %v485
  %v499 = vmul.f32 1.0, %v498
  %507 = vrot.lane.b32.xlu0 %v487, 47
  %v508 = vpop.permute.xlu0 %507
  %509 = vrot.lane.b32.xlu0 %v489, 47
  %v510 = vpop.permute.xlu0 %509
  %511 = vrot.lane.b32.xlu0 %v491, 47
  %v512 = vpop.permute.xlu0 %511
  %513 = vrot.lane.b32.xlu0 %v493, 47
  %v514 = vpop.permute.xlu0 %513
  %515 = vrot.lane.b32.xlu0 %v495, 47
  %v516 = vpop.permute.xlu0 %515
  %517 = vrot.lane.b32.xlu0 %v497, 47
  %v518 = vpop.permute.xlu0 %517
  %519 = vrot.lane.b32.xlu0 %v499, 47
  %v520 = vpop.permute.xlu0 %519
  %vm528 = vcmask 384000
  %v529 = vsel %vm528, %v133, %v508
  %v530 = vsel %vm528, %v138, %v510
  %v531 = vsel %vm528, %v143, %v512
  %v532 = vsel %vm528, %v148, %v514
  %v533 = vsel %vm528, %v153, %v516
  %v534 = vsel %vm528, %v158, %v518
  %v535 = vsel %vm528, %v163, %v520
  %vm536 = vcmask 400384
  %v537 = vsel %vm536, %v529, 0.0
  %v538 = vsel %vm536, %v530, 0.0
  %v539 = vsel %vm536, %v531, 0.0
  %v540 = vsel %vm536, %v532, 0.0
  %v541 = vsel %vm536, %v533, 0.0
  %v542 = vsel %vm536, %v534, 0.0
  %v543 = vsel %vm536, %v535, 0.0
  %544 = vst [vmem:[%s7] sm:$0xff] %v537
  %545 = vst [vmem:[%s7 + $0x8] sm:$0xff] %v538
  %546 = vst [vmem:[%s7 + $0x10] sm:$0xff] %v539
  %547 = vst [vmem:[%s7 + $0x18] sm:$0xff] %v540
  %548 = vst [vmem:[%s7 + $0x20] sm:$0xff] %v541
  %549 = vst [vmem:[%s7 + $0x28] sm:$0xff] %v542
  %550 = vst [vmem:[%s7 + $0x30] sm:$0xff] %v543
  // Predicated region
  $region30: #{embryoformer_heads.1} parent=0 // pred_check
    _
  $region31: #{embryoformer_heads.1} parent=0 // pred_check_branch
    %552 = sbr.rel (0) target = $region33
  $region32: #{embryoformer_heads.1} parent=0 // pred_region
    _
  $region33: #{embryoformer_heads.1} parent=0 // pred_fallthru
    _
  // Predicated region
  $region34: #{embryoformer_heads.1} parent=0 // pred_check
    _
  $region35: #{embryoformer_heads.1} parent=0 // pred_check_branch
    %554 = sbr.rel (0) target = $region37
  $region36: #{embryoformer_heads.1} parent=0 // pred_region
    _
  $region37: #{embryoformer_heads.1} parent=0 // pred_fallthru
    _

</llo_original>
